<compile_context>
chip_gen: v7x
topology: tpu7x:2x2x1
jax: 0.10.0
libtpu: 0.0.40
codegen_flags: <defaults>
</compile_context>

<pallas_src>
import functools
import math

import jax
import jax.numpy as jnp
from jax import lax
from jax.experimental import pallas as pl
from jax.experimental.pallas import tpu as pltpu


# ------------------------------- helpers ----------------------------------- #

def _gelu_new(x):
    # GPT-2 "gelu_new" (tanh approximation), computed in f32.
    c = math.sqrt(2.0 / math.pi)
    return 0.5 * x * (1.0 + jnp.tanh(c * (x + 0.044715 * x * x * x)))


def _pick_tile(dim, target, unit):
    """Largest tile <= target that evenly divides dim (whole dim if it fits)."""
    if dim <= target:
        return dim
    best = None
    t = unit
    while t <= target:
        if dim % t == 0:
            best = t
        t += unit
    if best is None:
        raise ValueError(f"dim={dim} is not tileable with unit={unit}; pad it.")
    return best


def _m_unit(m):
    # bf16 packs two rows per sublane: prefer 16-row granularity, fall back to 8.
    return 16 if m % 16 == 0 else 8


def _vmem_limit(nbytes):
    """Explicit scoped-VMEM limit: actual need x2 headroom, clamped to
    [32 MiB, 48 MiB].  48 MiB stays under v7x's 64 MiB physical VMEM; v5e/v6e
    have 128 MiB physical so raising above their 16/32 MiB defaults is safe."""
    return int(min(max(2 * nbytes, 32 << 20), 48 << 20))


def _bytes(shape, dtype):
    return int(math.prod(shape)) * jnp.dtype(dtype).itemsize


# ------------------------ fused LayerNorm + dense --------------------------- #

def _make_ln_dense_kernel(has_bias, activation, transpose_rhs):
    def kernel(*refs):
        idx = 0
        x_ref = refs[idx]; idx += 1
        g_ref = refs[idx]; idx += 1
        be_ref = refs[idx]; idx += 1
        w_ref = refs[idx]; idx += 1
        bias_ref = None
        if has_bias:
            bias_ref = refs[idx]; idx += 1
        o_ref = refs[idx]; idx += 1
        xln_ref = refs[idx]

        # LN computed once per M tile, reused for all N tiles (N axis is
        # "arbitrary"; scratch persists across grid steps).
        @pl.when(pl.program_id(1) == 0)
        def _():
            xf = x_ref[...].astype(jnp.float32)
            mu = jnp.mean(xf, axis=-1, keepdims=True)
            var = jnp.mean(jnp.square(xf - mu), axis=-1, keepdims=True)
            y = (xf - mu) * lax.rsqrt(var + 1e-5)
            y = y * g_ref[...] + be_ref[...]
            xln_ref[...] = y.astype(xln_ref.dtype)

        xln = xln_ref[...]
        if transpose_rhs:
            acc = lax.dot_general(xln, w_ref[...], (((1,), (1,)), ((), ())),
                                  preferred_element_type=jnp.float32)
        else:
            acc = jnp.dot(xln, w_ref[...], preferred_element_type=jnp.float32)
        if has_bias:
            acc = acc + bias_ref[...]
        if activation == "gelu":
            acc = _gelu_new(acc)
        o_ref[...] = acc.astype(o_ref.dtype)

    return kernel


def ln_dense(x, gamma, beta, w, bias=None, activation=None, transpose_rhs=False,
             out_dtype=jnp.bfloat16, tm_target=1024, tn_target=512):
    """y = act( LN(x) @ W + b ).  x:(M,K); W:(K,N)  (or (N,K) w/ transpose_rhs)."""
    M, K = x.shape
    N = w.shape[0] if transpose_rhs else w.shape[1]
    unit_m = _m_unit(M)
    # Keep >= 2 M blocks when possible: M is the only "parallel" axis here, and
    # v7x has 2 TensorCores per chip.
    tm_cap = tm_target if M < 2 * unit_m else min(tm_target, max(unit_m, M // 2))
    tm = _pick_tile(M, tm_cap, unit_m)
    tn = _pick_tile(N, tn_target, 128)
    has_bias = bias is not None

    g2 = gamma.reshape(1, K).astype(jnp.float32)
    b2 = beta.reshape(1, K).astype(jnp.float32)

    in_specs = [
        pl.BlockSpec((tm, K), lambda i, j: (i, 0)),
        pl.BlockSpec((1, K), lambda i, j: (0, 0)),
        pl.BlockSpec((1, K), lambda i, j: (0, 0)),
        (pl.BlockSpec((tn, K), lambda i, j: (j, 0)) if transpose_rhs
         else pl.BlockSpec((K, tn), lambda i, j: (0, j))),
    ]
    args = [x, g2, b2, w]
    if has_bias:
        in_specs.append(pl.BlockSpec((1, tn), lambda i, j: (0, j)))
        args.append(bias.reshape(1, N).astype(jnp.float32))

    est = (2 * (_bytes((tm, K), x.dtype) + 2 * _bytes((1, K), jnp.float32)
                + _bytes((tn, K), w.dtype)
                + (_bytes((1, tn), jnp.float32) if has_bias else 0))
           + 2 * _bytes((tm, tn), out_dtype)
           + _bytes((tm, K), jnp.bfloat16))

    kernel = _make_ln_dense_kernel(has_bias, activation, transpose_rhs)
    return pl.pallas_call(
        kernel,
        out_shape=jax.ShapeDtypeStruct((M, N), out_dtype),
        grid=(M // tm, N // tn),
        in_specs=in_specs,
        out_specs=pl.BlockSpec((tm, tn), lambda i, j: (i, j)),
        scratch_shapes=[pltpu.VMEM((tm, K), jnp.bfloat16)],
        compiler_params=pltpu.CompilerParams(
            dimension_semantics=("parallel", "arbitrary"),
            vmem_limit_bytes=_vmem_limit(est)),
    )(*args)


# --------- dense with K reduction (+bias/act/residual/fused final LN) ------- #

def _make_dense_kernel(has_bias, has_res, has_ln, activation, transpose_rhs):
    def kernel(*refs):
        idx = 0
        x_ref = refs[idx]; idx += 1
        w_ref = refs[idx]; idx += 1
        bias_ref = res_ref = lng_ref = lnb_ref = None
        if has_bias:
            bias_ref = refs[idx]; idx += 1
        if has_res:
            res_ref = refs[idx]; idx += 1
        if has_ln:
            lng_ref = refs[idx]; idx += 1
            lnb_ref = refs[idx]; idx += 1
        o_ref = refs[idx]; idx += 1
        acc_ref = refs[idx]

        k = pl.program_id(2)

        @pl.when(k == 0)
        def _():
            acc_ref[...] = jnp.zeros_like(acc_ref)

        if transpose_rhs:
            acc_ref[...] += lax.dot_general(
                x_ref[...], w_ref[...], (((1,), (1,)), ((), ())),
                preferred_element_type=jnp.float32)
        else:
            acc_ref[...] += jnp.dot(x_ref[...], w_ref[...],
                                    preferred_element_type=jnp.float32)

        @pl.when(k == pl.num_programs(2) - 1)
        def _():
            acc = acc_ref[...]
            if has_bias:
                acc = acc + bias_ref[...]
            if activation == "gelu":
                acc = _gelu_new(acc)
            if has_res:
                acc = acc + res_ref[...].astype(jnp.float32)
            if has_ln:   # fused final LayerNorm (requires tn == N: full row)
                mu = jnp.mean(acc, axis=-1, keepdims=True)
                var = jnp.mean(jnp.square(acc - mu), axis=-1, keepdims=True)
                acc = (acc - mu) * lax.rsqrt(var + 1e-5)
                acc = acc * lng_ref[...] + lnb_ref[...]
            o_ref[...] = acc.astype(o_ref.dtype)

    return kernel


def dense(x, w, bias=None, residual=None, ln_gamma=None, ln_beta=None,
          activation=None, transpose_rhs=False, out_dtype=jnp.bfloat16,
          tm_target=512, tn_target=512, tk_target=512):
    """y = LN?( act(x @ W + b) [+ residual] ).  x:(M,K); W:(K,N) or (N,K)."""
    M, K = x.shape
    N = w.shape[0] if transpose_rhs else w.shape[1]
    unit_m = _m_unit(M)
    tm = _pick_tile(M, tm_target, unit_m)
    tn = _pick_tile(N, tn_target, 128)
    tk = _pick_tile(K, tk_target, 128)
    has_bias = bias is not None
    has_res = residual is not None
    has_ln = ln_gamma is not None
    if has_ln and tn != N:
        raise ValueError("fused final LayerNorm needs tn == N (full feature row)")

    in_specs = [
        pl.BlockSpec((tm, tk), lambda i, j, k: (i, k)),
        (pl.BlockSpec((tn, tk), lambda i, j, k: (j, k)) if transpose_rhs
         else pl.BlockSpec((tk, tn), lambda i, j, k: (k, j))),
    ]
    args = [x, w]
    if has_bias:
        in_specs.append(pl.BlockSpec((1, tn), lambda i, j, k: (0, j)))
        args.append(bias.reshape(1, N).astype(jnp.float32))
    if has_res:
        in_specs.append(pl.BlockSpec((tm, tn), lambda i, j, k: (i, j)))
        args.append(residual)
    if has_ln:
        in_specs.append(pl.BlockSpec((1, tn), lambda i, j, k: (0, j)))
        in_specs.append(pl.BlockSpec((1, tn), lambda i, j, k: (0, j)))
        args.append(ln_gamma.reshape(1, N).astype(jnp.float32))
        args.append(ln_beta.reshape(1, N).astype(jnp.float32))

    est = (2 * (_bytes((tm, tk), x.dtype) + _bytes((tn, tk), w.dtype)
                + (_bytes((1, tn), jnp.float32) if has_bias else 0)
                + (_bytes((tm, tn), residual.dtype) if has_res else 0)
                + (2 * _bytes((1, tn), jnp.float32) if has_ln else 0))
           + 2 * _bytes((tm, tn), out_dtype)
           + _bytes((tm, tn), jnp.float32))

    kernel = _make_dense_kernel(has_bias, has_res, has_ln, activation,
                                transpose_rhs)
    return pl.pallas_call(
        kernel,
        out_shape=jax.ShapeDtypeStruct((M, N), out_dtype),
        grid=(M // tm, N // tn, K // tk),
        in_specs=in_specs,
        out_specs=pl.BlockSpec((tm, tn), lambda i, j, k: (i, j)),
        scratch_shapes=[pltpu.VMEM((tm, tn), jnp.float32)],
        compiler_params=pltpu.CompilerParams(
            dimension_semantics=("parallel", "parallel", "arbitrary"),
            vmem_limit_bytes=_vmem_limit(est)),
    )(*args)


# --------------------------------- attention -------------------------------- #

def _attn_kernel(mask_ref, q_ref, k_ref, v_ref, o_ref, bias_ref, *, hp, dh, scale):
    S = q_ref.shape[0]

    # Build the (S,S) causal+key-mask bias ONCE per batch (head-group axis g is
    # the inner "arbitrary" axis; the scratch persists across g steps).
    @pl.when(pl.program_id(1) == 0)
    def _():
        km = mask_ref[0]                                         # (1, S) f32
        rows = lax.broadcasted_iota(jnp.int32, (S, S), 0)
        cols = lax.broadcasted_iota(jnp.int32, (S, S), 1)
        allowed = jnp.logical_and(cols <= rows, km > 0.5)        # causal & key mask
        bias_ref[...] = jnp.where(allowed, 0.0, -1e9).astype(jnp.float32)

    bias = bias_ref[...]
    outs = []
    for p in range(hp):                                          # packed heads
        q = q_ref[:, p * dh:(p + 1) * dh] * scale                # scale folded into Q
        k = k_ref[:, p * dh:(p + 1) * dh]
        v = v_ref[:, p * dh:(p + 1) * dh]
        s = lax.dot_general(q, k, (((1,), (1,)), ((), ())),
                            preferred_element_type=jnp.float32) + bias
        m = jnp.max(s, axis=-1, keepdims=True)
        # bf16 exp on the EUP (consumed in bf16 by the PV matmul anyway); the
        # denominator is reduced in f32.
        e = jnp.exp((s - m).astype(jnp.bfloat16))
        denom = jnp.sum(e, axis=-1, keepdims=True, dtype=jnp.float32)
        o = jnp.dot(e, v, preferred_element_type=jnp.float32)
        o = o * pl.reciprocal(denom, approx=True)
        outs.append(o.astype(o_ref.dtype))
    o_ref[...] = outs[0] if hp == 1 else jnp.concatenate(outs, axis=-1)


def attention(qkv, key_mask, B, S, H, Dh, out_dtype=jnp.bfloat16):
    """qkv: (B*S, 3*D) bf16 (flat c_attn output); key_mask: (B, 1, S) f32.
    Reads Q/K/V directly from the flat buffer and writes a flat (B*S, D) output
    via BlockSpec index maps (no host-side reshape/transpose). Heads are packed
    so each block is hp*Dh (=128 for GPT-2) lanes wide."""
    D = H * Dh
    hp = min(H, max(1, 128 // Dh))
    while H % hp != 0:
        hp -= 1
    G = H // hp            # head groups
    bw = hp * Dh           # lane width per block
    scale = 1.0 / math.sqrt(Dh)
    # TODO(synk): flash-style KV tiling with online softmax is needed before
    #             scaling S much beyond ~1024 (S^2 f32 live tensors; v7x 64 MiB VMEM).
    kernel = functools.partial(_attn_kernel, hp=hp, dh=Dh, scale=scale)
    est = (2 * (_bytes((1, 1, S), jnp.float32) + 3 * _bytes((S, bw), qkv.dtype))
           + 2 * _bytes((S, bw), out_dtype)
           + _bytes((S, S), jnp.float32))
    return pl.pallas_call(
        kernel,
        out_shape=jax.ShapeDtypeStruct((B * S, D), out_dtype),
        grid=(B, G),
        in_specs=[
            pl.BlockSpec((1, 1, S), lambda b, g: (b, 0, 0)),        # key mask
            pl.BlockSpec((S, bw), lambda b, g: (b, g)),             # Q slice
            pl.BlockSpec((S, bw), lambda b, g: (b, G + g)),         # K slice
            pl.BlockSpec((S, bw), lambda b, g: (b, 2 * G + g)),     # V slice
        ],
        out_specs=pl.BlockSpec((S, bw), lambda b, g: (b, g)),
        scratch_shapes=[pltpu.VMEM((S, S), jnp.float32)],           # mask bias
        compiler_params=pltpu.CompilerParams(
            dimension_semantics=("parallel", "arbitrary"),
            vmem_limit_bytes=_vmem_limit(est)),
    )(key_mask, qkv, qkv, qkv)


# --------------------------- model (JAX glue) ------------------------------ #

def init_params(key, *, n_layer, D, H, V, max_pos, r, alpha):
    def nrm(k, shape, std=0.02, dtype=jnp.bfloat16):
        return (std * jax.random.normal(k, shape, jnp.float32)).astype(dtype)

    lora_scale = alpha / r
    keys = jax.random.split(key, 2 + n_layer)
    params = {
        "n_head": H,
        "wte": nrm(keys[0], (V, D)),                   # bf16; also the tied lm_head
        "wpe": nrm(keys[1], (max_pos, D), 0.01),
        "lnf_g": jnp.ones((D,), jnp.float32),
        "lnf_b": jnp.zeros((D,), jnp.float32),
        "layers": [],
    }
    for i in range(n_layer):
        lk = jax.random.split(keys[2 + i], 6)
        attn_w = nrm(lk[0], (D, 3 * D))
        lora_a_t = nrm(lk[1], (D, r))                  # PEFT lora_A (r,D), transposed
        lora_b_t = nrm(lk[2], (r, 3 * D), 0.01)        # PEFT lora_B (3D,r), transposed
        # Merge LoRA into the base weight once at load time (exact in eval mode;
        # LoRA dropout p=0.1 omitted) -> no K=8 matmuls / extra DMAs in-kernel.
        attn_w_eff = (attn_w.astype(jnp.float32)
                      + lora_scale * (lora_a_t.astype(jnp.float32)
                                      @ lora_b_t.astype(jnp.float32))
                      ).astype(jnp.bfloat16)
        params["layers"].append({
            "ln1_g": jnp.ones((D,), jnp.float32), "ln1_b": jnp.zeros((D,), jnp.float32),
            "attn_w": attn_w_eff,
            "attn_b": jnp.zeros((3 * D,), jnp.float32),
            "proj_w": nrm(lk[3], (D, D)),
            "proj_b": jnp.zeros((D,), jnp.float32),
            "ln2_g": jnp.ones((D,), jnp.float32), "ln2_b": jnp.zeros((D,), jnp.float32),
            "fc_w": nrm(lk[4], (D, 4 * D)),
            "fc_b": jnp.zeros((4 * D,), jnp.float32),
            "mlp_proj_w": nrm(lk[5], (4 * D, D)),
            "mlp_proj_b": jnp.zeros((D,), jnp.float32),
        })
    return params


def llm_forward(params, x, input_ids, prompt_mask):
    """x: (B, D) prefix embedding; input_ids: (B, T); prompt_mask: (B, T)."""
    B, T = input_ids.shape
    V, D = params["wte"].shape
    H = params["n_head"]
    Dh = D // H
    S = T + 1

    tok = jnp.take(params["wte"], input_ids, axis=0)                 # (B, T, D) bf16
    h = jnp.concatenate([x[:, None, :].astype(jnp.bfloat16), tok], axis=1)
    h = h + params["wpe"][:S][None]                                  # (B, S, D)
    h = h.reshape(B * S, D)                                          # bf16 residual stream

    # attention_mask[:, 0] = 1 ; attention_mask[:, 1:] = prompt mask (keys only)
    key_mask = jnp.concatenate(
        [jnp.ones((B, 1), jnp.float32), prompt_mask.astype(jnp.float32)],
        axis=1).reshape(B, 1, S)

    n_layer = len(params["layers"])
    for li, lp in enumerate(params["layers"]):
        last = li == n_layer - 1
        # --- attention block: LN1 + (LoRA-merged) c_attn fused; proj + residual fused ---
        qkv = ln_dense(h, lp["ln1_g"], lp["ln1_b"], lp["attn_w"], lp["attn_b"])
        attn = attention(qkv, key_mask, B, S, H, Dh)                 # (B*S, D)
        h = dense(attn, lp["proj_w"], lp["proj_b"], residual=h)      # + residual

        # --- MLP block: LN2 + c_fc(gelu) fused; proj + residual fused.
        #     On the last layer the final ln_f is fused into the epilogue too. ---
        m = ln_dense(h, lp["ln2_g"], lp["ln2_b"], lp["fc_w"], lp["fc_b"],
                     activation="gelu")                              # (B*S, 4D)
        h = dense(m, lp["mlp_proj_w"], lp["mlp_proj_b"], residual=h,
                  ln_gamma=params["lnf_g"] if last else None,
                  ln_beta=params["lnf_b"] if last else None,
                  tn_target=D if last else 512)

    # Tied lm_head: contract ln_f(h) against wte (V, D) directly (no wte.T copy).
    # K-tiled dense: the big vocab axis is "parallel" (keeps both v7x TCs busy),
    # and the large M tile streams wte ~once instead of once per small M tile.
    # f32 logits to match the PyTorch reference (bf16 would halve the writeback).
    logits = dense(h, params["wte"], transpose_rhs=True, out_dtype=jnp.float32,
                   tm_target=1024, tn_target=1024, tk_target=1024)
    return logits.reshape(B, S, V)


# --------------------------------- main ------------------------------------ #

if __name__ == "__main__":
    B, T, D, H, V, n_layer, r, alpha = 2, 7, 128, 4, 256, 2, 8, 32

    key = jax.random.PRNGKey(0)
    kp, kx, kid = jax.random.split(key, 3)

    params = init_params(kp, n_layer=n_layer, D=D, H=H, V=V,
                         max_pos=64, r=r, alpha=alpha)

    x = jax.random.normal(kx, (B, D), jnp.float32)             # prefix embedding
    input_ids = jax.random.randint(kid, (B, T), 0, V)          # "tokenized" prompts
    prompt_mask = jnp.ones((B, T), jnp.int32)

    logits = llm_forward(params, x, input_ids, prompt_mask)
    logits = jax.block_until_ready(logits)

    assert logits.shape == (B, T + 1, V), logits.shape
    assert bool(jnp.all(jnp.isfinite(logits)))
    print("KERNEL_OK")
</pallas_src>

<mosaic_0001>
module attributes {stable_mosaic.version = 11 : i64} {
  func.func @kernel(%arg0: i32, %arg1: i32, %arg2: memref<16x128xbf16, #tpu.memory_space<vmem>>, %arg3: memref<1x128xf32, #tpu.memory_space<vmem>>, %arg4: memref<1x128xf32, #tpu.memory_space<vmem>>, %arg5: memref<128x384xbf16, #tpu.memory_space<vmem>>, %arg6: memref<1x384xf32, #tpu.memory_space<vmem>>, %arg7: memref<16x384xbf16, #tpu.memory_space<vmem>>, %arg8: memref<16x128xbf16, #tpu.memory_space<vmem>>) attributes {dimension_semantics = [#tpu.dimension_semantics<parallel>, #tpu.dimension_semantics<arbitrary>], iteration_bounds = array<i64: 1, 1>, scalar_prefetch = 0 : i64, scratch_operands = 1 : i64, tpu.core_type = #tpu.core_type<tc>, window_params = [{transform_indices = @transform_0, window_bounds = array<i64: 16, 128>}, {pipeline_mode = #tpu.pipeline_mode<synchronous>, transform_indices = @transform_1, window_bounds = array<i64: 1, 128>}, {pipeline_mode = #tpu.pipeline_mode<synchronous>, transform_indices = @transform_2, window_bounds = array<i64: 1, 128>}, {transform_indices = @transform_3, window_bounds = array<i64: 128, 384>}, {transform_indices = @transform_4, window_bounds = array<i64: 1, 384>}, {transform_indices = @transform_5, window_bounds = array<i64: 16, 384>}]} {
    %c0_i32 = arith.constant 0 : i32
    %0 = arith.cmpi eq, %arg1, %c0_i32 : i32
    %1 = arith.extui %0 : i1 to i32
    %c0_i32_0 = arith.constant 0 : i32
    %2 = arith.cmpi ne, %1, %c0_i32_0 : i32
    scf.if %2 {
      %c0_8 = arith.constant 0 : index
      %c0_9 = arith.constant 0 : index
      %11 = vector.load %arg2[%c0_8, %c0_9] : memref<16x128xbf16, #tpu.memory_space<vmem>>, vector<16x128xbf16>
      %12 = arith.extf %11 : vector<16x128xbf16> to vector<16x128xf32>
      %cst_10 = arith.constant dense<0.000000e+00> : vector<16xf32>
      %13 = vector.multi_reduction <add>, %12, %cst_10 [1] : vector<16x128xf32> to vector<16xf32>
      %14 = vector.shape_cast %13 : vector<16xf32> to vector<16x1xf32>
      %cst_11 = arith.constant 1.280000e+02 : f32
      %15 = vector.broadcast %cst_11 : f32 to vector<16x1xf32>
      %16 = arith.divf %14, %15 : vector<16x1xf32>
      %17 = vector.broadcast %16 : vector<16x1xf32> to vector<16x128xf32>
      %18 = arith.subf %12, %17 : vector<16x128xf32>
      %19 = arith.mulf %18, %18 : vector<16x128xf32>
      %cst_12 = arith.constant dense<0.000000e+00> : vector<16xf32>
      %20 = vector.multi_reduction <add>, %19, %cst_12 [1] : vector<16x128xf32> to vector<16xf32>
      %21 = vector.shape_cast %20 : vector<16xf32> to vector<16x1xf32>
      %cst_13 = arith.constant 1.280000e+02 : f32
      %22 = vector.broadcast %cst_13 : f32 to vector<16x1xf32>
      %23 = arith.divf %21, %22 : vector<16x1xf32>
      %24 = vector.broadcast %16 : vector<16x1xf32> to vector<16x128xf32>
      %25 = arith.subf %12, %24 : vector<16x128xf32>
      %cst_14 = arith.constant 9.99999974E-6 : f32
      %26 = vector.broadcast %cst_14 : f32 to vector<16x1xf32>
      %27 = arith.addf %23, %26 : vector<16x1xf32>
      %28 = math.rsqrt %27 : vector<16x1xf32>
      %29 = vector.broadcast %28 : vector<16x1xf32> to vector<16x128xf32>
      %30 = arith.mulf %25, %29 : vector<16x128xf32>
      %c0_15 = arith.constant 0 : index
      %c0_16 = arith.constant 0 : index
      %31 = vector.load %arg3[%c0_15, %c0_16] : memref<1x128xf32, #tpu.memory_space<vmem>>, vector<1x128xf32>
      %32 = vector.broadcast %31 : vector<1x128xf32> to vector<16x128xf32>
      %33 = arith.mulf %30, %32 : vector<16x128xf32>
      %c0_17 = arith.constant 0 : index
      %c0_18 = arith.constant 0 : index
      %34 = vector.load %arg4[%c0_17, %c0_18] : memref<1x128xf32, #tpu.memory_space<vmem>>, vector<1x128xf32>
      %35 = vector.broadcast %34 : vector<1x128xf32> to vector<16x128xf32>
      %36 = arith.addf %33, %35 : vector<16x128xf32>
      %37 = arith.truncf %36 : vector<16x128xf32> to vector<16x128xbf16>
      %c0_19 = arith.constant 0 : index
      %c0_20 = arith.constant 0 : index
      %38 = vector.load %arg8[%c0_19, %c0_20] : memref<16x128xbf16, #tpu.memory_space<vmem>>, vector<16x128xbf16>
      tpu.vector_store %arg8[%c0_19, %c0_20], %37 {strides = array<i32>} : memref<16x128xbf16, #tpu.memory_space<vmem>>, vector<16x128xbf16>,
    } else {
    }
    %c0 = arith.constant 0 : index
    %c0_1 = arith.constant 0 : index
    %3 = vector.load %arg8[%c0, %c0_1] : memref<16x128xbf16, #tpu.memory_space<vmem>>, vector<16x128xbf16>
    %c0_2 = arith.constant 0 : index
    %c0_3 = arith.constant 0 : index
    %4 = vector.load %arg5[%c0_2, %c0_3] : memref<128x384xbf16, #tpu.memory_space<vmem>>, vector<128x384xbf16>
    %cst = arith.constant dense<0.000000e+00> : vector<16x384xf32>
    %5 = tpu.matmul %3, %4, %cst {dimension_numbers = #tpu.dot_dimension_numbers<[1], [0], [0], [1], [0, 0, 1, 1], [], []>} : vector<16x128xbf16>, vector<128x384xbf16>, vector<16x384xf32> -> vector<16x384xf32>
    %c0_4 = arith.constant 0 : index
    %c0_5 = arith.constant 0 : index
    %6 = vector.load %arg6[%c0_4, %c0_5] : memref<1x384xf32, #tpu.memory_space<vmem>>, vector<1x384xf32>
    %7 = vector.broadcast %6 : vector<1x384xf32> to vector<16x384xf32>
    %8 = arith.addf %5, %7 : vector<16x384xf32>
    %9 = arith.truncf %8 : vector<16x384xf32> to vector<16x384xbf16>
    %c0_6 = arith.constant 0 : index
    %c0_7 = arith.constant 0 : index
    %10 = vector.load %arg7[%c0_6, %c0_7] : memref<16x384xbf16, #tpu.memory_space<vmem>>, vector<16x384xbf16>
    tpu.vector_store %arg7[%c0_6, %c0_7], %9 {strides = array<i32>} : memref<16x384xbf16, #tpu.memory_space<vmem>>, vector<16x384xbf16>,
    return
  }
  func.func @transform_0(%arg0: i32, %arg1: i32) -> (i32, i32) {
    %c0_i32 = arith.constant 0 : i32
    %c0_i32_0 = arith.constant 0 : i32
    return %arg0, %c0_i32 : i32, i32
  }
  func.func @transform_1(%arg0: i32, %arg1: i32) -> (i32, i32) {
    %c0_i32 = arith.constant 0 : i32
    %c0_i32_0 = arith.constant 0 : i32
    %c0_i32_1 = arith.constant 0 : i32
    return %c0_i32, %c0_i32_0 : i32, i32
  }
  func.func @transform_2(%arg0: i32, %arg1: i32) -> (i32, i32) {
    %c0_i32 = arith.constant 0 : i32
    %c0_i32_0 = arith.constant 0 : i32
    %c0_i32_1 = arith.constant 0 : i32
    return %c0_i32, %c0_i32_0 : i32, i32
  }
  func.func @transform_3(%arg0: i32, %arg1: i32) -> (i32, i32) {
    %c0_i32 = arith.constant 0 : i32
    %c0_i32_0 = arith.constant 0 : i32
    return %c0_i32, %arg1 : i32, i32
  }
  func.func @transform_4(%arg0: i32, %arg1: i32) -> (i32, i32) {
    %c0_i32 = arith.constant 0 : i32
    %c0_i32_0 = arith.constant 0 : i32
    return %c0_i32, %arg1 : i32, i32
  }
  func.func @transform_5(%arg0: i32, %arg1: i32) -> (i32, i32) {
    %c0_i32 = arith.constant 0 : i32
    return %arg0, %arg1 : i32, i32
  }
}

</mosaic_0001>

<llo_original>
// kernel: tpu_custom_call.1
$region0: #{tpu_custom_call.1}
  #allocation0 [shape = 'u32[]', space=smem, size = 0x4, offset = 0x4, fixed_abs, tag = 'smem constant byte address 0x4 - core index']
  #allocation1 [shape = 'u32[144,128]{1,0:T(1,128)}', space=vmem, size = 0x12000, scoped, tag = 'internal scratch']
  #allocation2 [shape = 'bf16[16,128]{1,0:T(16,128)(2,1)}', space=vmem, size = 0x1000, scoped, tag = 'scratch operand']
  %s0 = inlined_call_operand.hbm [shape: bf16[16,128], index: 0, kind: input, shape index: {}]
  %s1 = inlined_call_operand.vmem [shape: f32[1,128], index: 1, kind: input, shape index: {}]
  %s2 = inlined_call_operand.vmem [shape: f32[1,128], index: 2, kind: input, shape index: {}]
  %s3 = inlined_call_operand.hbm [shape: bf16[128,384], index: 3, kind: input, shape index: {}]
  %s4 = inlined_call_operand.vmem [shape: f32[1,384], index: 4, kind: input, shape index: {}]
  %s5 = inlined_call_operand.hbm [shape: bf16[16,384], index: 5, kind: output, shape index: {}]
  %s6 = sld [smem:[#allocation0]]
  $region42: #{tpu_custom_call.1} parent=0
    _
  %s8 = ssub.s32 1, %s6
  %s9 = scalar_select 0, %s8, %s6
  $region1: #{tpu_custom_call.1} parent=0
    #allocation3 [shape = 'u8[4096]{0}', space=vmem, size = 0x1000, scoped, tag = 'input window, operand 0, single buffered']
    #allocation4 [shape = 's32[1]{0}', space=sflag, size = 0x4, scoped, tag = 'scoped memory for tpu_custom_call.1']
    #allocation5 [shape = 's32[1]{0}', space=sflag, size = 0x4, scoped, tag = 'scoped memory for tpu_custom_call.1']
    #allocation6 [shape = 'u8[98304]{0}', space=vmem, size = 0x18000, scoped, tag = 'input window, operand 3, single buffered']
    #allocation7 [shape = 's32[1]{0}', space=sflag, size = 0x4, scoped, tag = 'scoped memory for tpu_custom_call.1']
    #allocation8 [shape = 'u8[12288]{0}', space=vmem, size = 0x3000, scoped, tag = 'output window, operand 0, single buffered']
    %10 = vsyncpa [#allocation4], 0
    %11 = vsyncpa [#allocation7], 0
    %12 = vsyncpa [#allocation5], 0
    // Predicated region
    $region2: #{tpu_custom_call.1} parent=1 // pred_check
      _
    $region3: #{tpu_custom_call.1} parent=1 // pred_check_branch
      %14 = sbr.rel (0) target = $region5
    $region4: #{tpu_custom_call.1} parent=1 // pred_region
      %s16 = ssub.s32 128, 128
      %17 = vsyncadd [#allocation4], %s16
      %s18 = sshll.u32 [#allocation3], 4
      %s19 = int_to_ptr.vmem [resolvable:$true] %s18
      %24 = dma.hbm_to_vmem [thread:$0]  %s0, 128, %s19, [#allocation4], 64, 64, 4
    $region5: #{tpu_custom_call.1} parent=1 // pred_fallthru
      _
    // Predicated region
    $region6: #{tpu_custom_call.1} parent=1 // pred_check
      _
    $region7: #{tpu_custom_call.1} parent=1 // pred_check_branch
      %26 = sbr.rel (0) target = $region9
    $region8: #{tpu_custom_call.1} parent=1 // pred_region
      _
    $region9: #{tpu_custom_call.1} parent=1 // pred_fallthru
      _
    // Predicated region
    $region10: #{tpu_custom_call.1} parent=1 // pred_check
      _
    $region11: #{tpu_custom_call.1} parent=1 // pred_check_branch
      %28 = sbr.rel (0) target = $region13
    $region12: #{tpu_custom_call.1} parent=1 // pred_region
      _
    $region13: #{tpu_custom_call.1} parent=1 // pred_fallthru
      _
    // Predicated region
    $region14: #{tpu_custom_call.1} parent=1 // pred_check
      _
    $region15: #{tpu_custom_call.1} parent=1 // pred_check_branch
      %30 = sbr.rel (0) target = $region17
    $region16: #{tpu_custom_call.1} parent=1 // pred_region
      %s32 = ssub.s32 3072, 3072
      %33 = vsyncadd [#allocation7], %s32
      %s34 = sshll.u32 [#allocation6], 4
      %s35 = int_to_ptr.vmem [resolvable:$true] %s34
      %40 = dma.hbm_to_vmem [thread:$0]  %s3, 3072, %s35, [#allocation7], 192, 192, 12
    $region17: #{tpu_custom_call.1} parent=1 // pred_fallthru
      _
    // Predicated region
    $region18: #{tpu_custom_call.1} parent=1 // pred_check
      _
    $region19: #{tpu_custom_call.1} parent=1 // pred_check_branch
      %42 = sbr.rel (0) target = $region21
    $region20: #{tpu_custom_call.1} parent=1 // pred_region
      _
    $region21: #{tpu_custom_call.1} parent=1 // pred_fallthru
      _
    // Predicated region
    $region22: #{tpu_custom_call.1} parent=1 // pred_check
      _
    $region23: #{tpu_custom_call.1} parent=1 // pred_check_branch
      %44 = sbr.rel (0) target = $region25
    $region24: #{tpu_custom_call.1} parent=1 // pred_region
      %45 = dma.done [#allocation4], 128
    $region25: #{tpu_custom_call.1} parent=1 // pred_fallthru
      _
    // Predicated region
    $region26: #{tpu_custom_call.1} parent=1 // pred_check
      _
    $region27: #{tpu_custom_call.1} parent=1 // pred_check_branch
      %47 = sbr.rel (0) target = $region29
    $region28: #{tpu_custom_call.1} parent=1 // pred_region
      %48 = dma.done [#allocation7], 3072
    $region29: #{tpu_custom_call.1} parent=1 // pred_fallthru
      _
    %p50 = scmp.eq.s32.totalorder 0, 0
    // Predicated region
    $region30: #{tpu_custom_call.1} parent=1 // pred_check
      %p51 = pneg %p50
    $region31: #{tpu_custom_call.1} parent=1 // pred_check_branch
      %53 = sbr.rel (%p51) target = $region33
    $region32: #{tpu_custom_call.1} parent=1 // pred_region
      %v54 = vld [vmem:[#allocation3] sm:$0xf]
      %v55 = vld [vmem:[#allocation3 + $0x4] sm:$0xf]
      %v56 = vunpack.c.l.bf16 %v54
      %v57 = vunpack.c.l.bf16 %v55
      %58 = vadd.xlane.f32.xlu0 %v56
      %v59 = vpop.xlane.xlu0 %58
      %60 = vadd.xlane.f32.xlu0 %v57
      %v61 = vpop.xlane.xlu0 %60
      %v62 = vrcp.pop 128.0
      %v63 = vmul.f32 %v59, %v62
      %v64 = vmul.f32 %v61, %v62
      %v65 = vsub.f32 %v56, %v63
      %v66 = vsub.f32 %v57, %v64
      %v67 = vmul.f32 %v65, %v65
      %v68 = vmul.f32 %v66, %v66
      %69 = vadd.xlane.f32.xlu0 %v67
      %v70 = vpop.xlane.xlu0 %69
      %71 = vadd.xlane.f32.xlu0 %v68
      %v72 = vpop.xlane.xlu0 %71
      %v73 = vmul.f32 %v70, %v62
      %v74 = vmul.f32 %v72, %v62
      %v75 = vadd.f32 %v73, 1e-05
      %v76 = vadd.f32 %v74, 1e-05
      %v77 = vrsqrt.pop %v75
      %v78 = vrsqrt.pop %v76
      %v79 = vmul.f32 %v65, %v77
      %v80 = vmul.f32 %v66, %v78
      %v81 = vld [vmem:[%s1] sm:$0x1]
      %v83 = vlaneseq
      %v84 = vshrl.u32 %v83, 7
      %v85 = vsub.s32 0, %v84
      %v86 = vrot.slane %v81, %v85
      %v88 = vmul.f32 %v79, %v86
      %v89 = vmul.f32 %v80, %v86
      %v90 = vld [vmem:[%s2] sm:$0x1]
      %v92 = vlaneseq
      %v93 = vshrl.u32 %v92, 7
      %v94 = vsub.s32 0, %v93
      %v95 = vrot.slane %v90, %v94
      %v97 = vadd.f32 %v88, %v95
      %v98 = vadd.f32 %v89, %v95
      %v99 = vpack.c.bf16 %v98, %v97
      %100 = vst [vmem:[#allocation2] sm:$0xff] %v99
    $region33: #{tpu_custom_call.1} parent=1 // pred_fallthru
      _
    %v101 = vld [vmem:[#allocation2] sm:$0xff]
    %v102 = vld [vmem:[#allocation6] sm:$0xff]
    %v103 = vld [vmem:[#allocation6 + $0x8] sm:$0xf]
    %v104 = vld [vmem:[#allocation6 + $0xc] sm:$0xff]
    %v105 = vld [vmem:[#allocation6 + $0x14] sm:$0xf]
    %v106 = vld [vmem:[#allocation6 + $0x18] sm:$0xff]
    %v107 = vld [vmem:[#allocation6 + $0x20] sm:$0xf]
    %v108 = vld [vmem:[#allocation6 + $0x24] sm:$0xff]
    %v109 = vld [vmem:[#allocation6 + $0x2c] sm:$0xf]
    %v110 = vld [vmem:[#allocation6 + $0x30] sm:$0xff]
    %v111 = vld [vmem:[#allocation6 + $0x38] sm:$0xf]
    %v112 = vld [vmem:[#allocation6 + $0x3c] sm:$0xff]
    %v113 = vld [vmem:[#allocation6 + $0x44] sm:$0xf]
    %v114 = vld [vmem:[#allocation6 + $0x48] sm:$0xff]
    %v115 = vld [vmem:[#allocation6 + $0x50] sm:$0xf]
    %v116 = vld [vmem:[#allocation6 + $0x54] sm:$0xff]
    %v117 = vld [vmem:[#allocation6 + $0x5c] sm:$0xf]
    %v118 = vld [vmem:[#allocation6 + $0x60] sm:$0xff]
    %v119 = vld [vmem:[#allocation6 + $0x68] sm:$0xf]
    %v120 = vld [vmem:[#allocation6 + $0x6c] sm:$0xff]
    %v121 = vld [vmem:[#allocation6 + $0x74] sm:$0xf]
    %v122 = vld [vmem:[#allocation6 + $0x78] sm:$0xff]
    %v123 = vld [vmem:[#allocation6 + $0x80] sm:$0xf]
    %v124 = vld [vmem:[#allocation6 + $0x84] sm:$0xff]
    %v125 = vld [vmem:[#allocation6 + $0x8c] sm:$0xf]
    %v126 = vld [vmem:[#allocation6 + $0x90] sm:$0xff]
    %v127 = vld [vmem:[#allocation6 + $0x98] sm:$0xf]
    %v128 = vld [vmem:[#allocation6 + $0x9c] sm:$0xff]
    %v129 = vld [vmem:[#allocation6 + $0xa4] sm:$0xf]
    %v130 = vld [vmem:[#allocation6 + $0xa8] sm:$0xff]
    %v131 = vld [vmem:[#allocation6 + $0xb0] sm:$0xf]
    %v132 = vld [vmem:[#allocation6 + $0xb4] sm:$0xff]
    %v133 = vld [vmem:[#allocation6 + $0xbc] sm:$0xf]
    %v134 = vld [vmem:[%s4] sm:$0x7]
    %v136 = vlaneseq
    %v137 = vshrl.u32 %v136, 7
    %v138 = vsub.s32 0, %v137
    %v139 = vrot.slane %v134, %v138
    %v140 = vlaneseq
    %v141 = vshrl.u32 %v140, 7
    %v142 = vsub.s32 1, %v141
    %v143 = vrot.slane %v134, %v142
    %v144 = vlaneseq
    %v145 = vshrl.u32 %v144, 7
    %v146 = vsub.s32 2, %v145
    %v147 = vrot.slane %v134, %v146
    %v183 = vunpack.c.l.b16 %v102
    %v184 = vunpack.c.h.b16 %v102
    %v185 = vunpack.c.l.b16 %v103
    %v186 = vunpack.c.l.b16 %v104
    %v187 = vunpack.c.h.b16 %v104
    %v188 = vunpack.c.l.b16 %v105
    %v189 = vunpack.c.l.b16 %v106
    %v190 = vunpack.c.h.b16 %v106
    %v191 = vunpack.c.l.b16 %v107
    %v192 = vunpack.c.l.b16 %v108
    %v193 = vunpack.c.h.b16 %v108
    %v194 = vunpack.c.l.b16 %v109
    %v195 = vunpack.c.l.b16 %v110
    %v196 = vunpack.c.h.b16 %v110
    %v197 = vunpack.c.l.b16 %v111
    %v198 = vunpack.c.l.b16 %v112
    %v199 = vunpack.c.h.b16 %v112
    %v200 = vunpack.c.l.b16 %v113
    %v201 = vunpack.c.l.b16 %v114
    %v202 = vunpack.c.h.b16 %v114
    %v203 = vunpack.c.l.b16 %v115
    %v204 = vunpack.c.l.b16 %v116
    %v205 = vunpack.c.h.b16 %v116
    %v206 = vunpack.c.l.b16 %v117
    %v207 = vunpack.c.l.b16 %v118
    %v208 = vunpack.c.h.b16 %v118
    %v209 = vunpack.c.l.b16 %v119
    %v210 = vunpack.c.l.b16 %v120
    %v211 = vunpack.c.h.b16 %v120
    %v212 = vunpack.c.l.b16 %v121
    %v213 = vunpack.c.l.b16 %v122
    %v214 = vunpack.c.h.b16 %v122
    %v215 = vunpack.c.l.b16 %v123
    %v216 = vunpack.c.l.b16 %v124
    %v217 = vunpack.c.h.b16 %v124
    %v218 = vunpack.c.l.b16 %v125
    %v219 = vunpack.c.l.b16 %v126
    %v220 = vunpack.c.h.b16 %v126
    %v221 = vunpack.c.l.b16 %v127
    %v222 = vunpack.c.l.b16 %v128
    %v223 = vunpack.c.h.b16 %v128
    %v224 = vunpack.c.l.b16 %v129
    %v225 = vunpack.c.l.b16 %v130
    %v226 = vunpack.c.h.b16 %v130
    %v227 = vunpack.c.l.b16 %v131
    %v228 = vunpack.c.l.b16 %v132
    %v229 = vunpack.c.h.b16 %v132
    %v230 = vunpack.c.l.b16 %v133
    %v231 = vpack.c.b16 %v186, %v183
    %v232 = vpack.c.b16 %v187, %v184
    %v233 = vpack.c.b16 %v188, %v185
    %v234 = vpack.c.b16 %v192, %v189
    %v235 = vpack.c.b16 %v193, %v190
    %v236 = vpack.c.b16 %v194, %v191
    %v237 = vpack.c.b16 %v198, %v195
    %v238 = vpack.c.b16 %v199, %v196
    %v239 = vpack.c.b16 %v200, %v197
    %v240 = vpack.c.b16 %v204, %v201
    %v241 = vpack.c.b16 %v205, %v202
    %v242 = vpack.c.b16 %v206, %v203
    %v243 = vpack.c.b16 %v210, %v207
    %v244 = vpack.c.b16 %v211, %v208
    %v245 = vpack.c.b16 %v212, %v209
    %v246 = vpack.c.b16 %v216, %v213
    %v247 = vpack.c.b16 %v217, %v214
    %v248 = vpack.c.b16 %v218, %v215
    %v249 = vpack.c.b16 %v222, %v219
    %v250 = vpack.c.b16 %v223, %v220
    %v251 = vpack.c.b16 %v224, %v221
    %v252 = vpack.c.b16 %v228, %v225
    %v253 = vpack.c.b16 %v229, %v226
    %v254 = vpack.c.b16 %v230, %v227
    %279 = vmatprep.subr.bf16.mxu0 %v232
    %280 = vmatpush1.bf16.msra.mxu0 %v231
    %281 = vmatprep.subr.bf16.mxu0 %v235
    %282 = vmatpush1.bf16.msra.mxu0 %v234
    %283 = vmatprep.subr.bf16.mxu0 %v238
    %284 = vmatpush1.bf16.msra.mxu0 %v237
    %285 = vmatprep.subr.bf16.mxu0 %v241
    %286 = vmatpush1.bf16.msra.mxu0 %v240
    %287 = vmatprep.subr.bf16.mxu0 %v244
    %288 = vmatpush1.bf16.msra.mxu0 %v243
    %289 = vmatprep.subr.bf16.mxu0 %v247
    %290 = vmatpush1.bf16.msra.mxu0 %v246
    %291 = vmatprep.subr.bf16.mxu0 %v250
    %292 = vmatpush1.bf16.msra.mxu0 %v249
    %293 = vmatprep.subr.bf16.mxu0 %v253
    %294 = vmatpush1.bf16.msra.mxu0 %v252
    %295 = vmatprep.subr.bf16.mxu0 0
    %296 = vmatpush1.bf16.msra.mxu0 0
    %297 = vmatprep.subr.bf16.mxu0 0
    %298 = vmatpush1.bf16.msra.mxu0 0
    %299 = vmatprep.subr.bf16.mxu0 0
    %300 = vmatpush1.bf16.msra.mxu0 0
    %301 = vmatprep.subr.bf16.mxu0 0
    %302 = vmatpush1.bf16.msra.mxu0 0
    %303 = vmatprep.subr.bf16.mxu0 0
    %304 = vmatpush1.bf16.msra.mxu0 0
    %305 = vmatprep.subr.bf16.mxu0 0
    %306 = vmatpush1.bf16.msra.mxu0 0
    %307 = vmatprep.subr.bf16.mxu0 0
    %308 = vmatpush1.bf16.msra.mxu0 0
    %309 = vmatprep.subr.bf16.mxu0 0
    %310 = vmatpush1.bf16.msra.mxu0 0
    %311 = vmatprep.mubr.bf16.mxu0 0
    %312 = vmatmul.mubr.bf16.gmra.mrb[0].mxu0 %v101
    %v313 = vpop.f32.mrb[0].mxu0
    %v314 = vadd.f32 %v139, %v313
    %v315 = vpop.f32.mrb[0].mxu0
    %v316 = vadd.f32 %v143, %v315
    %v317 = vpop.f32.mrb[0].mxu0
    %v318 = vadd.f32 %v139, %v317
    %v319 = vpop.f32.mrb[0].mxu0
    %v320 = vadd.f32 %v143, %v319
    %321 = vdwg.mxu0
    %322 = vmatprep.subr.bf16.mxu0 0
    %323 = vmatpush1.bf16.msra.mxu0 %v233
    %324 = vmatprep.subr.bf16.mxu0 0
    %325 = vmatpush1.bf16.msra.mxu0 %v236
    %326 = vmatprep.subr.bf16.mxu0 0
    %327 = vmatpush1.bf16.msra.mxu0 %v239
    %328 = vmatprep.subr.bf16.mxu0 0
    %329 = vmatpush1.bf16.msra.mxu0 %v242
    %330 = vmatprep.subr.bf16.mxu0 0
    %331 = vmatpush1.bf16.msra.mxu0 %v245
    %332 = vmatprep.subr.bf16.mxu0 0
    %333 = vmatpush1.bf16.msra.mxu0 %v248
    %334 = vmatprep.subr.bf16.mxu0 0
    %335 = vmatpush1.bf16.msra.mxu0 %v251
    %336 = vmatprep.subr.bf16.mxu0 0
    %337 = vmatpush1.bf16.msra.mxu0 %v254
    %338 = vmatprep.subr.bf16.mxu0 0
    %339 = vmatpush1.bf16.msra.mxu0 0
    %340 = vmatprep.subr.bf16.mxu0 0
    %341 = vmatpush1.bf16.msra.mxu0 0
    %342 = vmatprep.subr.bf16.mxu0 0
    %343 = vmatpush1.bf16.msra.mxu0 0
    %344 = vmatprep.subr.bf16.mxu0 0
    %345 = vmatpush1.bf16.msra.mxu0 0
    %346 = vmatprep.subr.bf16.mxu0 0
    %347 = vmatpush1.bf16.msra.mxu0 0
    %348 = vmatprep.subr.bf16.mxu0 0
    %349 = vmatpush1.bf16.msra.mxu0 0
    %350 = vmatprep.subr.bf16.mxu0 0
    %351 = vmatpush1.bf16.msra.mxu0 0
    %352 = vmatprep.subr.bf16.mxu0 0
    %353 = vmatpush1.bf16.msra.mxu0 0
    %354 = vmatprep.mubr.bf16.mxu0 0
    %355 = vmatmul.mubr.bf16.gmra.mrb[0].mxu0 %v101
    %v356 = vpop.f32.mrb[0].mxu0
    %v357 = vadd.f32 %v147, %v356
    %v358 = vpop.f32.mrb[0].mxu0
    %v359 = vpop.f32.mrb[0].mxu0
    %v360 = vadd.f32 %v147, %v359
    %v361 = vpop.f32.mrb[0].mxu0
    %362 = vdwg.mxu0
    %v363 = vpack.c.bf16 %v318, %v314
    %v364 = vpack.c.bf16 %v320, %v316
    %v365 = vpack.c.bf16 %v360, %v357
    %v369 = vunpack.c.l.b16 %v363
    %v370 = vunpack.c.l.b16 %v364
    %v371 = vunpack.c.l.b16 %v365
    %v372 = vunpack.c.h.b16 %v363
    %v373 = vunpack.c.h.b16 %v364
    %v374 = vunpack.c.h.b16 %v365
    %v375 = vpack.c.b16 %v370, %v369
    %v376 = vpack.c.b16 %v371, %v371
    %v377 = vpack.c.b16 %v373, %v372
    %v378 = vpack.c.b16 %v374, %v374
    %383 = vst [vmem:[#allocation8] sm:$0xff] %v375
    %384 = vst [vmem:[#allocation8 + $0x8] sm:$0xf] %v376
    %385 = vst [vmem:[#allocation8 + $0xc] sm:$0xff] %v377
    %386 = vst [vmem:[#allocation8 + $0x14] sm:$0xf] %v378
    // Predicated region
    $region34: #{tpu_custom_call.1} parent=1 // pred_check
      _
    $region35: #{tpu_custom_call.1} parent=1 // pred_check_branch
      %388 = sbr.rel (0) target = $region37
    $region36: #{tpu_custom_call.1} parent=1 // pred_region
      %s390 = ssub.s32 384, 384
      %391 = vsyncadd [#allocation5], %s390
      %s392 = sshll.u32 [#allocation8], 4
      %s393 = int_to_ptr.vmem [resolvable:$true] %s392
      %398 = dma.vmem_to_hbm [thread:$0]  %s393, 384, %s5, [#allocation5], 192, 192, 12
    $region37: #{tpu_custom_call.1} parent=1 // pred_fallthru
      _
    // Predicated region
    $region38: #{tpu_custom_call.1} parent=1 // pred_check
      _
    $region39: #{tpu_custom_call.1} parent=1 // pred_check_branch
      %400 = sbr.rel (0) target = $region41
    $region40: #{tpu_custom_call.1} parent=1 // pred_region
      %401 = dma.done [#allocation5], 384
    $region41: #{tpu_custom_call.1} parent=1 // pred_fallthru
      _
    %402 = vsyncpa [#allocation4], 1
    %403 = vsyncpa [#allocation7], 1
    %404 = vsyncpa [#allocation5], 1

</llo_original>
